<compile_context>
chip_gen: v7x
topology: tpu7x:2x2x1
jax: 0.10.0
libtpu: 0.0.40
codegen_flags: <defaults>
</compile_context>

<pallas_src>
import functools

import jax
import jax.numpy as jnp
from jax.experimental import pallas as pl
from jax.experimental.pallas import tpu as pltpu


# --------------------------------------------------------------------------- #
# Kernel
# --------------------------------------------------------------------------- #
def _ensemble_dyn_kernel(
    xu_ref,   # (E*(dim_x+dim_u), bt)  raw states+controls, batch on LANES
    w1t_ref,  # (E*H, E*(dim_x+dim_u)) block-diag W1^T, normalizer folded in
    b1_ref,   # (E*H, 1)
    w2t_ref,  # (E*H, E*H)             block-diag W2^T
    b2_ref,   # (E*H, 1)
    w3t_ref,  # (E*dim_x, E*H)         block-diag W3^T, k_x folded in
    b3_ref,   # (E*dim_x, 1)           k_x folded in
    out_ref,  # (E*dim_x, bt)
    *,
    edx,      # static: E*dim_x (rows of xu holding the raw state)
):
    xu = xu_ref[...]

    # Layer 1: one fused matmul (normalizer already folded into w1t / b1).
    h1 = jnp.dot(w1t_ref[...], xu, preferred_element_type=jnp.float32) + b1_ref[...]
    h1 = jnp.maximum(h1, 0.0)

    # Layer 2: lane-dense (E*H, E*H) @ (E*H, bt).
    h2 = jnp.dot(w2t_ref[...], h1, preferred_element_type=jnp.float32) + b2_ref[...]
    h2 = jnp.maximum(h2, 0.0)

    # Layer 3 (k_x folded) + residual add of the raw state (static sub-slice).
    y = jnp.dot(w3t_ref[...], h2, preferred_element_type=jnp.float32) + b3_ref[...]
    out_ref[...] = (y + xu[:edx, :]).astype(out_ref.dtype)


# --------------------------------------------------------------------------- #
# One-time parameter folding (hoisted out of the per-step forward)
# --------------------------------------------------------------------------- #
def _block_diag_t(w):
    """(E, a, b) per-member (in, out) weights -> (E*b, E*a) block-diag of W^T."""
    e, a, b = w.shape
    eye = jnp.eye(e, dtype=w.dtype)
    return jnp.einsum("ef,eab->ebfa", eye, w).reshape(e * b, e * a)


def _round_up(v, m):
    return -(-v // m) * m


def prepare_ensemble_params(params, normalizers):
    """Fold Normalizer / residual de-normalization into the weights and build
    the transposed block-diagonal matrices. Call ONCE per parameter or
    normalizer update (NOT once per forward step).

    params: stacked per-ensemble MLP weights, (in, out) layout:
        w1 (E, dim_x+dim_u, H), b1 (E, 1, H),
        w2 (E, H, H),           b2 (E, 1, H),
        w3 (E, H, dim_x),       b3 (E, 1, dim_x)
    normalizers: (k_x, b_x, k_u, b_u); each (dim,), (1, dim) (shared) or
        (E, dim) (per-member, as torch.func.stack_module_state buffers give).
    """
    f32 = jnp.float32
    w1 = jnp.asarray(params["w1"], f32)
    w2 = jnp.asarray(params["w2"], f32)
    w3 = jnp.asarray(params["w3"], f32)
    E, din, H = w1.shape
    dim_x = w3.shape[-1]
    dim_u = din - dim_x
    b1 = jnp.asarray(params["b1"], f32).reshape(E, H)
    b2 = jnp.asarray(params["b2"], f32).reshape(E, H)
    b3 = jnp.asarray(params["b3"], f32).reshape(E, dim_x)

    k_x, b_x, k_u, b_u = normalizers
    kx = jnp.broadcast_to(jnp.asarray(k_x, f32).reshape(-1, dim_x), (E, dim_x))
    bx = jnp.broadcast_to(jnp.asarray(b_x, f32).reshape(-1, dim_x), (E, dim_x))
    ku = jnp.broadcast_to(jnp.asarray(k_u, f32).reshape(-1, dim_u), (E, dim_u))
    bu = jnp.broadcast_to(jnp.asarray(b_u, f32).reshape(-1, dim_u), (E, dim_u))

    # Fold the Normalizer ((v - b)/k) into layer-1 weights + bias.
    w1x, w1u = w1[:, :dim_x, :], w1[:, dim_x:, :]
    w1x_eff = w1x / kx[:, :, None]
    w1u_eff = w1u / ku[:, :, None]
    b1_eff = (b1
              - jnp.einsum("ei,eih->eh", bx / kx, w1x)
              - jnp.einsum("ej,ejh->eh", bu / ku, w1u))

    # Fold the residual de-normalization (k_x * out) into layer 3.
    w3_eff = w3 * kx[:, None, :]
    b3_eff = b3 * kx

    # Block-diagonal, transposed (output-major) weights; fused x|u columns.
    w1t = jnp.concatenate(
        [_block_diag_t(w1x_eff), _block_diag_t(w1u_eff)], axis=1)   # (E*H, E*din)
    w2t = _block_diag_t(w2)                                         # (E*H, E*H)
    w3t = _block_diag_t(w3_eff)                                     # (E*dx, E*H)

    return {
        "w1t": w1t, "b1": b1_eff.reshape(E * H, 1),
        "w2t": w2t, "b2": b2.reshape(E * H, 1),
        "w3t": w3t, "b3": b3_eff.reshape(E * dim_x, 1),
        "dims": (E, dim_x, dim_u, H),
    }


# --------------------------------------------------------------------------- #
# Forward wrapper (per-step hot path)
# --------------------------------------------------------------------------- #
def ensemble_dynamics_batch(x, u, folded, *, batch_tile=None):
    """
    x: (E, B, dim_x), u: (E, B, dim_u); folded = prepare_ensemble_params(...)
    returns: (E, B, dim_x)
    """
    f32 = jnp.float32
    E, dim_x, dim_u, H = folded["dims"]
    din = dim_x + dim_u
    B = x.shape[1]

    # (E, B, d) -> (E*d, B): features on sublanes, batch on LANES (lane-dense).
    # NOTE: if the caller keeps activations in this layout across a rollout,
    # these transposes (and the one on the output) disappear entirely.
    x_t = jnp.transpose(x.astype(f32), (0, 2, 1)).reshape(E * dim_x, B)
    u_t = jnp.transpose(u.astype(f32), (0, 2, 1)).reshape(E * dim_u, B)
    xu_t = jnp.concatenate([x_t, u_t], axis=0)               # (E*din, B)

    # --- batch tiling: lane-dense tiles, ragged B handled by zero-padding ---
    if batch_tile is None:
        # small/medium B: one step; large B: >=4 steps so "parallel" can shard
        # across TensorCores (v7x) and DMA overlaps compute.
        bt = B if B <= 1024 else max(128, min(4096, (B // 4) // 128 * 128))
    else:
        bt = int(batch_tile)
    if bt >= B:
        bt, b_pad = B, B
    else:
        bt = _round_up(bt, 128)                               # unmasked vst
        if bt >= B:
            bt, b_pad = B, B
        else:
            b_pad = _round_up(B, bt)
    if b_pad > B:
        xu_t = jnp.pad(xu_t, ((0, 0), (0, b_pad - B)))

    grid = (b_pad // bt,)

    w1t, b1 = folded["w1t"], folded["b1"]
    w2t, b2 = folded["w2t"], folded["b2"]
    w3t, b3 = folded["w3t"], folded["b3"]

    def const_spec(arr):
        # Weights/biases: whole array, constant index_map (never re-fetched).
        return pl.BlockSpec(arr.shape, lambda i: (0, 0))

    # Explicit VMEM budget: weights + double-buffered I/O tiles + activations.
    wbytes = 4 * (w1t.size + w2t.size + w3t.size + b1.size + b2.size + b3.size)
    iobytes = 4 * (E * din + E * dim_x) * bt
    actbytes = 4 * 2 * (E * H) * bt
    vmem_limit = int(min(max(2 * (2 * wbytes + 2 * iobytes + actbytes),
                             32 << 20), 48 << 20))

    out_t = pl.pallas_call(
        functools.partial(_ensemble_dyn_kernel, edx=E * dim_x),
        out_shape=jax.ShapeDtypeStruct((E * dim_x, b_pad), f32),
        grid=grid,
        in_specs=[
            pl.BlockSpec((E * din, bt), lambda i: (0, i)),    # xu^T tile
            const_spec(w1t), const_spec(b1),
            const_spec(w2t), const_spec(b2),
            const_spec(w3t), const_spec(b3),
        ],
        out_specs=pl.BlockSpec((E * dim_x, bt), lambda i: (0, i)),
        compiler_params=pltpu.CompilerParams(
            dimension_semantics=("parallel",),
            vmem_limit_bytes=vmem_limit,
        ),
    )(xu_t, w1t, b1, w2t, b2, w3t, b3)

    out_t = out_t[:, :B]
    return out_t.reshape(E, dim_x, B).transpose(0, 2, 1).astype(x.dtype)


def ensemble_dynamics_batch_from_raw(x, u, params, normalizers, *, batch_tile=None):
    """Convenience one-shot entry (folds params on every call; prefer calling
    prepare_ensemble_params once and reusing it in rollout loops)."""
    folded = prepare_ensemble_params(params, normalizers)
    return ensemble_dynamics_batch(x, u, folded, batch_tile=batch_tile)


# --------------------------------------------------------------------------- #
# Pure-JAX reference (mirrors the vmapped PyTorch forward)
# --------------------------------------------------------------------------- #
def reference_dynamics_batch(x, u, params, normalizers):
    E, B, dim_x = x.shape
    dim_u = u.shape[-1]
    f32 = jnp.float32
    k_x, b_x, k_u, b_u = [
        jnp.broadcast_to(jnp.asarray(v, f32).reshape(-1, d), (E, d))
        for v, d in zip(normalizers, (dim_x, dim_x, dim_u, dim_u))
    ]

    def single(xe, ue, kx, bx, ku, bu, w1, b1, w2, b2, w3, b3):
        xn = (xe - bx) / kx
        un = (ue - bu) / ku
        inp = jnp.concatenate([xn, un], axis=-1)
        h1 = jnp.maximum(inp @ w1 + b1, 0.0)
        h2 = jnp.maximum(h1 @ w2 + b2, 0.0)
        out = h2 @ w3 + b3
        return kx * out + xe

    return jax.vmap(single)(
        x, u, k_x, b_x, k_u, b_u,
        params["w1"], params["b1"], params["w2"],
        params["b2"], params["w3"], params["b3"],
    )


# --------------------------------------------------------------------------- #
if __name__ == "__main__":
    E = 4         # ensemble size
    B = 256       # batch size (2 lane-dense tiles of 128)
    dim_x = 4
    dim_u = 2
    H = 32        # MLP hidden width (E*H = 128 lanes for the middle GEMM)
    dim_in = dim_x + dim_u

    key = jax.random.PRNGKey(0)
    keys = jax.random.split(key, 12)

    x = jax.random.normal(keys[0], (E, B, dim_x), dtype=jnp.float32)
    u = jax.random.normal(keys[1], (E, B, dim_u), dtype=jnp.float32)

    scale = 0.2
    params = {
        "w1": scale * jax.random.normal(keys[2], (E, dim_in, H), dtype=jnp.float32),
        "b1": scale * jax.random.normal(keys[3], (E, 1, H), dtype=jnp.float32),
        "w2": scale * jax.random.normal(keys[4], (E, H, H), dtype=jnp.float32),
        "b2": scale * jax.random.normal(keys[5], (E, 1, H), dtype=jnp.float32),
        "w3": scale * jax.random.normal(keys[6], (E, H, dim_x), dtype=jnp.float32),
        "b3": scale * jax.random.normal(keys[7], (E, 1, dim_x), dtype=jnp.float32),
    }

    # Case 1: default identity Normalizer (module default ctor), tiled batch.
    norm_id = (
        jnp.ones((1, dim_x), jnp.float32),
        jnp.zeros((1, dim_x), jnp.float32),
        jnp.ones((1, dim_u), jnp.float32),
        jnp.zeros((1, dim_u), jnp.float32),
    )
    folded_id = prepare_ensemble_params(params, norm_id)   # hoisted, done once
    out1 = jax.block_until_ready(
        ensemble_dynamics_batch(x, u, folded_id, batch_tile=128))
    ref1 = reference_dynamics_batch(x, u, params, norm_id)
    assert out1.shape == (E, B, dim_x)
    assert jnp.allclose(out1, ref1, atol=2e-4, rtol=2e-4), "identity-normalizer mismatch"

    # Case 2: per-member normalizers (as stack_module_state buffers would be),
    # default (whole-batch) tiling -- exercises the weight folding path.
    norm_pm = (
        0.5 + jnp.abs(jax.random.normal(keys[8], (E, dim_x), jnp.float32)),
        0.3 * jax.random.normal(keys[9], (E, dim_x), jnp.float32),
        0.5 + jnp.abs(jax.random.normal(keys[10], (E, dim_u), jnp.float32)),
        0.3 * jax.random.normal(keys[11], (E, dim_u), jnp.float32),
    )
    folded_pm = prepare_ensemble_params(params, norm_pm)
    out2 = jax.block_until_ready(ensemble_dynamics_batch(x, u, folded_pm))
    ref2 = reference_dynamics_batch(x, u, params, norm_pm)
    assert jnp.allclose(out2, ref2, atol=2e-4, rtol=2e-4), "per-member-normalizer mismatch"

    print("KERNEL_OK")
</pallas_src>

<mosaic_0001>
module attributes {stable_mosaic.version = 11 : i64} {
  func.func @_ensemble_dyn_kernel(%arg0: i32, %arg1: memref<24x128xf32, #tpu.memory_space<vmem>>, %arg2: memref<128x24xf32, #tpu.memory_space<vmem>>, %arg3: memref<128x1xf32, #tpu.memory_space<vmem>>, %arg4: memref<128x128xf32, #tpu.memory_space<vmem>>, %arg5: memref<128x1xf32, #tpu.memory_space<vmem>>, %arg6: memref<16x128xf32, #tpu.memory_space<vmem>>, %arg7: memref<16x1xf32, #tpu.memory_space<vmem>>, %arg8: memref<16x128xf32, #tpu.memory_space<vmem>>) attributes {dimension_semantics = [#tpu.dimension_semantics<parallel>], iteration_bounds = array<i64: 2>, scalar_prefetch = 0 : i64, scratch_operands = 0 : i64, tpu.core_type = #tpu.core_type<tc>, window_params = [{transform_indices = @transform_0, window_bounds = array<i64: 24, 128>}, {pipeline_mode = #tpu.pipeline_mode<synchronous>, transform_indices = @transform_1, window_bounds = array<i64: 128, 24>}, {pipeline_mode = #tpu.pipeline_mode<synchronous>, transform_indices = @transform_2, window_bounds = array<i64: 128, 1>}, {pipeline_mode = #tpu.pipeline_mode<synchronous>, transform_indices = @transform_3, window_bounds = array<i64: 128, 128>}, {pipeline_mode = #tpu.pipeline_mode<synchronous>, transform_indices = @transform_4, window_bounds = array<i64: 128, 1>}, {pipeline_mode = #tpu.pipeline_mode<synchronous>, transform_indices = @transform_5, window_bounds = array<i64: 16, 128>}, {pipeline_mode = #tpu.pipeline_mode<synchronous>, transform_indices = @transform_6, window_bounds = array<i64: 16, 1>}, {transform_indices = @transform_7, window_bounds = array<i64: 16, 128>}]} {
    %c0 = arith.constant 0 : index
    %c0_0 = arith.constant 0 : index
    %0 = vector.load %arg1[%c0, %c0_0] : memref<24x128xf32, #tpu.memory_space<vmem>>, vector<24x128xf32>
    %c0_1 = arith.constant 0 : index
    %c0_2 = arith.constant 0 : index
    %1 = vector.load %arg2[%c0_1, %c0_2] : memref<128x24xf32, #tpu.memory_space<vmem>>, vector<128x24xf32>
    %cst = arith.constant dense<0.000000e+00> : vector<128x128xf32>
    %2 = tpu.matmul %1, %0, %cst {dimension_numbers = #tpu.dot_dimension_numbers<[1], [0], [0], [1], [0, 0, 1, 1], [], []>} : vector<128x24xf32>, vector<24x128xf32>, vector<128x128xf32> -> vector<128x128xf32>
    %c0_3 = arith.constant 0 : index
    %c0_4 = arith.constant 0 : index
    %3 = vector.load %arg3[%c0_3, %c0_4] : memref<128x1xf32, #tpu.memory_space<vmem>>, vector<128x1xf32>
    %4 = vector.broadcast %3 : vector<128x1xf32> to vector<128x128xf32>
    %5 = arith.addf %2, %4 : vector<128x128xf32>
    %cst_5 = arith.constant 0.000000e+00 : f32
    %6 = vector.broadcast %cst_5 : f32 to vector<128x128xf32>
    %7 = arith.maximumf %5, %6 : vector<128x128xf32>
    %c0_6 = arith.constant 0 : index
    %c0_7 = arith.constant 0 : index
    %8 = vector.load %arg4[%c0_6, %c0_7] : memref<128x128xf32, #tpu.memory_space<vmem>>, vector<128x128xf32>
    %cst_8 = arith.constant dense<0.000000e+00> : vector<128x128xf32>
    %9 = tpu.matmul %8, %7, %cst_8 {dimension_numbers = #tpu.dot_dimension_numbers<[1], [0], [0], [1], [0, 0, 1, 1], [], []>} : vector<128x128xf32>, vector<128x128xf32>, vector<128x128xf32> -> vector<128x128xf32>
    %c0_9 = arith.constant 0 : index
    %c0_10 = arith.constant 0 : index
    %10 = vector.load %arg5[%c0_9, %c0_10] : memref<128x1xf32, #tpu.memory_space<vmem>>, vector<128x1xf32>
    %11 = vector.broadcast %10 : vector<128x1xf32> to vector<128x128xf32>
    %12 = arith.addf %9, %11 : vector<128x128xf32>
    %cst_11 = arith.constant 0.000000e+00 : f32
    %13 = vector.broadcast %cst_11 : f32 to vector<128x128xf32>
    %14 = arith.maximumf %12, %13 : vector<128x128xf32>
    %c0_12 = arith.constant 0 : index
    %c0_13 = arith.constant 0 : index
    %15 = vector.load %arg6[%c0_12, %c0_13] : memref<16x128xf32, #tpu.memory_space<vmem>>, vector<16x128xf32>
    %cst_14 = arith.constant dense<0.000000e+00> : vector<16x128xf32>
    %16 = tpu.matmul %15, %14, %cst_14 {dimension_numbers = #tpu.dot_dimension_numbers<[1], [0], [0], [1], [0, 0, 1, 1], [], []>} : vector<16x128xf32>, vector<128x128xf32>, vector<16x128xf32> -> vector<16x128xf32>
    %c0_15 = arith.constant 0 : index
    %c0_16 = arith.constant 0 : index
    %17 = vector.load %arg7[%c0_15, %c0_16] : memref<16x1xf32, #tpu.memory_space<vmem>>, vector<16x1xf32>
    %18 = vector.broadcast %17 : vector<16x1xf32> to vector<16x128xf32>
    %19 = arith.addf %16, %18 : vector<16x128xf32>
    %20 = vector.extract_strided_slice %0 {offsets = [0, 0], sizes = [16, 128], strides = [1, 1]} : vector<24x128xf32> to vector<16x128xf32>
    %21 = arith.addf %19, %20 : vector<16x128xf32>
    %c0_17 = arith.constant 0 : index
    %c0_18 = arith.constant 0 : index
    %22 = vector.load %arg8[%c0_17, %c0_18] : memref<16x128xf32, #tpu.memory_space<vmem>>, vector<16x128xf32>
    tpu.vector_store %arg8[%c0_17, %c0_18], %21 {strides = array<i32>} : memref<16x128xf32, #tpu.memory_space<vmem>>, vector<16x128xf32>,
    return
  }
  func.func @transform_0(%arg0: i32) -> (i32, i32) {
    %c0_i32 = arith.constant 0 : i32
    %c0_i32_0 = arith.constant 0 : i32
    return %c0_i32, %arg0 : i32, i32
  }
  func.func @transform_1(%arg0: i32) -> (i32, i32) {
    %c0_i32 = arith.constant 0 : i32
    %c0_i32_0 = arith.constant 0 : i32
    %c0_i32_1 = arith.constant 0 : i32
    return %c0_i32, %c0_i32_0 : i32, i32
  }
  func.func @transform_2(%arg0: i32) -> (i32, i32) {
    %c0_i32 = arith.constant 0 : i32
    %c0_i32_0 = arith.constant 0 : i32
    %c0_i32_1 = arith.constant 0 : i32
    return %c0_i32, %c0_i32_0 : i32, i32
  }
  func.func @transform_3(%arg0: i32) -> (i32, i32) {
    %c0_i32 = arith.constant 0 : i32
    %c0_i32_0 = arith.constant 0 : i32
    %c0_i32_1 = arith.constant 0 : i32
    return %c0_i32, %c0_i32_0 : i32, i32
  }
  func.func @transform_4(%arg0: i32) -> (i32, i32) {
    %c0_i32 = arith.constant 0 : i32
    %c0_i32_0 = arith.constant 0 : i32
    %c0_i32_1 = arith.constant 0 : i32
    return %c0_i32, %c0_i32_0 : i32, i32
  }
  func.func @transform_5(%arg0: i32) -> (i32, i32) {
    %c0_i32 = arith.constant 0 : i32
    %c0_i32_0 = arith.constant 0 : i32
    %c0_i32_1 = arith.constant 0 : i32
    return %c0_i32, %c0_i32_0 : i32, i32
  }
  func.func @transform_6(%arg0: i32) -> (i32, i32) {
    %c0_i32 = arith.constant 0 : i32
    %c0_i32_0 = arith.constant 0 : i32
    %c0_i32_1 = arith.constant 0 : i32
    return %c0_i32, %c0_i32_0 : i32, i32
  }
  func.func @transform_7(%arg0: i32) -> (i32, i32) {
    %c0_i32 = arith.constant 0 : i32
    %c0_i32_0 = arith.constant 0 : i32
    return %c0_i32, %arg0 : i32, i32
  }
}

</mosaic_0001>

<llo_original>
// kernel: tpu_custom_call.1
$region0: #{tpu_custom_call.1}
  #allocation0 [shape = 'u32[]', space=smem, size = 0x4, offset = 0x4, fixed_abs, tag = 'smem constant byte address 0x4 - core index']
  #allocation1 [shape = 'u32[144,128]{1,0:T(1,128)}', space=vmem, size = 0x12000, scoped, tag = 'internal scratch']
  %s0 = inlined_call_operand.vmem [shape: f32[24,256], index: 0, kind: input, shape index: {}]
  %s1 = inlined_call_operand.vmem [shape: f32[128,24], index: 1, kind: input, shape index: {}]
  %s2 = inlined_call_operand.vmem [shape: f32[128,1], index: 2, kind: input, shape index: {}]
  %s3 = inlined_call_operand.vmem [shape: f32[128,128], index: 3, kind: input, shape index: {}]
  %s4 = inlined_call_operand.vmem [shape: f32[128,1], index: 4, kind: input, shape index: {}]
  %s5 = inlined_call_operand.vmem [shape: f32[16,128], index: 5, kind: input, shape index: {}]
  %s6 = inlined_call_operand.vmem [shape: f32[16,1], index: 6, kind: input, shape index: {}]
  %s7 = inlined_call_operand.hbm [shape: f32[16,256], index: 7, kind: output, shape index: {}]
  %s8 = sld [smem:[#allocation0]]
  $region99: #{tpu_custom_call.1} parent=0
    _
  %s10 = ssub.s32 1, %s8
  %s11 = scalar_select 0, %s10, %s8
  $region1: #{tpu_custom_call.1} parent=0
    #allocation2 [shape = 'u8[24576]{0}', space=vmem, size = 0x6000, scoped, tag = 'input window, operand 0']
    #allocation3 [shape = 'u8[16384]{0}', space=vmem, size = 0x4000, scoped, tag = 'output window, operand 0']
    #allocation4 [shape = 's32[2]{0}', space=sflag, size = 0x8, scoped, tag = 'scoped memory for tpu_custom_call.1']
    %12 = vsyncpa [#allocation4], 0
    %s13 = scalar_lea.sflag [#allocation4], 1
    %14 = vsyncpa %s13, 0
    loop: start=0, step=1, limit=4
    $region2: #{tpu_custom_call.1} parent=1 // loop_pre_header
      _
    $region3: #{tpu_custom_call.1} parent=1 // loop_header
      %s16 = sphi 0, %s20
      %p17 = scmp.ge.s32.totalorder %s16, 4
      %s26 = sphi 0, %s28
      %s29 = sphi 0, %s26
      %s30 = sphi 0, %s29
      %s46 = sphi 0, %s30
      %s50 = sphi 0, %s50
      %s52 = sphi 0, %s50
      %s53 = sphi 0, %s52
      %s67 = sphi 0, %s53
      %s71 = sphi 0, %s71
      %s73 = sphi 0, %s71
      %s74 = sphi 0, %s73
      %s88 = sphi 0, %s74
      %s92 = sphi 0, %s92
      %s94 = sphi 0, %s92
      %s95 = sphi 0, %s94
      %s109 = sphi 0, %s95
      %s113 = sphi 0, %s113
      %s115 = sphi 0, %s113
      %s116 = sphi 0, %s115
      %s130 = sphi 0, %s116
      %s134 = sphi 0, %s134
      %s136 = sphi 0, %s134
      %s137 = sphi 0, %s136
      %s151 = sphi 0, %s137
      %s155 = sphi 0, %s155
      %s157 = sphi 0, %s155
      %s158 = sphi 0, %s157
      %s172 = sphi 0, %s158
      %s178 = sphi 0, %s180
      %s181 = sphi 0, %s178
      %s182 = sphi 0, %s181
      %s198 = sphi 0, %s182
    $region4: #{tpu_custom_call.1} parent=1 // loop_header_branch
      %19 = sbr.rel (%p17) target = $region8
    $region5: #{tpu_custom_call.1} parent=1 // loop_body
      %s21 = ssub.s32 %s16, 1
      %s22 = ssub.s32 %s16, 2
      %s23 = sadd.s32 %s16, 1
      %s24 = ssub.s32 %s16, %s23
      %p25 = scmp.eq.s32.totalorder %s24, 0
      %s27 = sadd.s32 %s26, 1
      %s28 = scalar_select %p25, %s26, %s27
      %p31 = pneg %p25
      %p32 = scmp.eq.s32.totalorder %s16, 1
      %p33 = por %p31, %p32
      %p34 = scmp.ne.s32.totalorder %s26, %s29
      %p35 = scmp.eq.s32.totalorder %s16, 0
      %p36 = por %p34, %p35
      %p37 = scmp.ne.s32.totalorder %s26, %s29
      %p38 = scmp.eq.s32.totalorder %s21, 1
      %p39 = por %p37, %p38
      %p40 = scmp.ne.s32.totalorder %s29, %s30
      %p41 = scmp.eq.s32.totalorder %s21, 0
      %p42 = por %p40, %p41
      %p43 = scmp.ne.s32.totalorder %s29, %s30
      %p44 = scmp.eq.s32.totalorder %s22, 1
      %p45 = por %p43, %p44
      %p47 = scmp.ne.s32.totalorder %s30, %s46
      %p48 = scmp.eq.s32.totalorder %s22, 0
      %p49 = por %p47, %p48
      %s51 = sadd.s32 %s50, 1
      %p54 = scmp.eq.s32.totalorder %s16, 1
      %p55 = scmp.ne.s32.totalorder %s50, %s52
      %p56 = scmp.eq.s32.totalorder %s16, 0
      %p57 = por %p55, %p56
      %p58 = scmp.ne.s32.totalorder %s50, %s52
      %p59 = scmp.eq.s32.totalorder %s21, 1
      %p60 = por %p58, %p59
      %p61 = scmp.ne.s32.totalorder %s52, %s53
      %p62 = scmp.eq.s32.totalorder %s21, 0
      %p63 = por %p61, %p62
      %p64 = scmp.ne.s32.totalorder %s52, %s53
      %p65 = scmp.eq.s32.totalorder %s22, 1
      %p66 = por %p64, %p65
      %p68 = scmp.ne.s32.totalorder %s53, %s67
      %p69 = scmp.eq.s32.totalorder %s22, 0
      %p70 = por %p68, %p69
      %s72 = sadd.s32 %s71, 1
      %p75 = scmp.eq.s32.totalorder %s16, 1
      %p76 = scmp.ne.s32.totalorder %s71, %s73
      %p77 = scmp.eq.s32.totalorder %s16, 0
      %p78 = por %p76, %p77
      %p79 = scmp.ne.s32.totalorder %s71, %s73
      %p80 = scmp.eq.s32.totalorder %s21, 1
      %p81 = por %p79, %p80
      %p82 = scmp.ne.s32.totalorder %s73, %s74
      %p83 = scmp.eq.s32.totalorder %s21, 0
      %p84 = por %p82, %p83
      %p85 = scmp.ne.s32.totalorder %s73, %s74
      %p86 = scmp.eq.s32.totalorder %s22, 1
      %p87 = por %p85, %p86
      %p89 = scmp.ne.s32.totalorder %s74, %s88
      %p90 = scmp.eq.s32.totalorder %s22, 0
      %p91 = por %p89, %p90
      %s93 = sadd.s32 %s92, 1
      %p96 = scmp.eq.s32.totalorder %s16, 1
      %p97 = scmp.ne.s32.totalorder %s92, %s94
      %p98 = scmp.eq.s32.totalorder %s16, 0
      %p99 = por %p97, %p98
      %p100 = scmp.ne.s32.totalorder %s92, %s94
      %p101 = scmp.eq.s32.totalorder %s21, 1
      %p102 = por %p100, %p101
      %p103 = scmp.ne.s32.totalorder %s94, %s95
      %p104 = scmp.eq.s32.totalorder %s21, 0
      %p105 = por %p103, %p104
      %p106 = scmp.ne.s32.totalorder %s94, %s95
      %p107 = scmp.eq.s32.totalorder %s22, 1
      %p108 = por %p106, %p107
      %p110 = scmp.ne.s32.totalorder %s95, %s109
      %p111 = scmp.eq.s32.totalorder %s22, 0
      %p112 = por %p110, %p111
      %s114 = sadd.s32 %s113, 1
      %p117 = scmp.eq.s32.totalorder %s16, 1
      %p118 = scmp.ne.s32.totalorder %s113, %s115
      %p119 = scmp.eq.s32.totalorder %s16, 0
      %p120 = por %p118, %p119
      %p121 = scmp.ne.s32.totalorder %s113, %s115
      %p122 = scmp.eq.s32.totalorder %s21, 1
      %p123 = por %p121, %p122
      %p124 = scmp.ne.s32.totalorder %s115, %s116
      %p125 = scmp.eq.s32.totalorder %s21, 0
      %p126 = por %p124, %p125
      %p127 = scmp.ne.s32.totalorder %s115, %s116
      %p128 = scmp.eq.s32.totalorder %s22, 1
      %p129 = por %p127, %p128
      %p131 = scmp.ne.s32.totalorder %s116, %s130
      %p132 = scmp.eq.s32.totalorder %s22, 0
      %p133 = por %p131, %p132
      %s135 = sadd.s32 %s134, 1
      %p138 = scmp.eq.s32.totalorder %s16, 1
      %p139 = scmp.ne.s32.totalorder %s134, %s136
      %p140 = scmp.eq.s32.totalorder %s16, 0
      %p141 = por %p139, %p140
      %p142 = scmp.ne.s32.totalorder %s134, %s136
      %p143 = scmp.eq.s32.totalorder %s21, 1
      %p144 = por %p142, %p143
      %p145 = scmp.ne.s32.totalorder %s136, %s137
      %p146 = scmp.eq.s32.totalorder %s21, 0
      %p147 = por %p145, %p146
      %p148 = scmp.ne.s32.totalorder %s136, %s137
      %p149 = scmp.eq.s32.totalorder %s22, 1
      %p150 = por %p148, %p149
      %p152 = scmp.ne.s32.totalorder %s137, %s151
      %p153 = scmp.eq.s32.totalorder %s22, 0
      %p154 = por %p152, %p153
      %s156 = sadd.s32 %s155, 1
      %p159 = scmp.eq.s32.totalorder %s16, 1
      %p160 = scmp.ne.s32.totalorder %s155, %s157
      %p161 = scmp.eq.s32.totalorder %s16, 0
      %p162 = por %p160, %p161
      %p163 = scmp.ne.s32.totalorder %s155, %s157
      %p164 = scmp.eq.s32.totalorder %s21, 1
      %p165 = por %p163, %p164
      %p166 = scmp.ne.s32.totalorder %s157, %s158
      %p167 = scmp.eq.s32.totalorder %s21, 0
      %p168 = por %p166, %p167
      %p169 = scmp.ne.s32.totalorder %s157, %s158
      %p170 = scmp.eq.s32.totalorder %s22, 1
      %p171 = por %p169, %p170
      %p173 = scmp.ne.s32.totalorder %s158, %s172
      %p174 = scmp.eq.s32.totalorder %s22, 0
      %p175 = por %p173, %p174
      %s176 = ssub.s32 %s16, %s23
      %p177 = scmp.eq.s32.totalorder %s176, 0
      %s179 = sadd.s32 %s178, 1
      %s180 = scalar_select %p177, %s178, %s179
      %p183 = pneg %p177
      %p184 = scmp.eq.s32.totalorder %s16, 1
      %p185 = por %p183, %p184
      %p186 = scmp.ne.s32.totalorder %s178, %s181
      %p187 = scmp.eq.s32.totalorder %s16, 0
      %p188 = por %p186, %p187
      %p189 = scmp.ne.s32.totalorder %s178, %s181
      %p190 = scmp.eq.s32.totalorder %s21, 1
      %p191 = por %p189, %p190
      %p192 = scmp.ne.s32.totalorder %s181, %s182
      %p193 = scmp.eq.s32.totalorder %s21, 0
      %p194 = por %p192, %p193
      %p195 = scmp.ne.s32.totalorder %s181, %s182
      %p196 = scmp.eq.s32.totalorder %s22, 1
      %p197 = por %p195, %p196
      %p199 = scmp.ne.s32.totalorder %s182, %s198
      %p200 = scmp.eq.s32.totalorder %s22, 0
      %p201 = por %p199, %p200
      %p202 = scmp.le.s32.totalorder 1, %s16
      %p203 = scmp.lt.s32.totalorder %s16, 3
      %p204 = pnand %p202, %p203
      %p205 = pneg %p204
      // Predicated region
      $region9: #{tpu_custom_call.1} parent=5 // pred_check
        _
      $region10: #{tpu_custom_call.1} parent=5 // pred_check_branch
        %207 = sbr.rel (%p204) target = $region12
      $region11: #{tpu_custom_call.1} parent=5 // pred_region
        %s208 = ssub.s32 %s16, 1
        // Predicated region
        $region13: #{tpu_custom_call.1} parent=11 // pred_check
          %p209 = pneg %p63
        $region14: #{tpu_custom_call.1} parent=11 // pred_check_branch
          %211 = sbr.rel (%p209) target = $region16
        $region15: #{tpu_custom_call.1} parent=11 // pred_region
          _
        $region16: #{tpu_custom_call.1} parent=11 // pred_fallthru
          _
        // Predicated region
        $region17: #{tpu_custom_call.1} parent=11 // pred_check
          %p212 = pneg %p84
        $region18: #{tpu_custom_call.1} parent=11 // pred_check_branch
          %214 = sbr.rel (%p212) target = $region20
        $region19: #{tpu_custom_call.1} parent=11 // pred_region
          _
        $region20: #{tpu_custom_call.1} parent=11 // pred_fallthru
          _
        // Predicated region
        $region21: #{tpu_custom_call.1} parent=11 // pred_check
          %p215 = pneg %p105
        $region22: #{tpu_custom_call.1} parent=11 // pred_check_branch
          %217 = sbr.rel (%p215) target = $region24
        $region23: #{tpu_custom_call.1} parent=11 // pred_region
          _
        $region24: #{tpu_custom_call.1} parent=11 // pred_fallthru
          _
        // Predicated region
        $region25: #{tpu_custom_call.1} parent=11 // pred_check
          %p218 = pneg %p126
        $region26: #{tpu_custom_call.1} parent=11 // pred_check_branch
          %220 = sbr.rel (%p218) target = $region28
        $region27: #{tpu_custom_call.1} parent=11 // pred_region
          _
        $region28: #{tpu_custom_call.1} parent=11 // pred_fallthru
          _
        // Predicated region
        $region29: #{tpu_custom_call.1} parent=11 // pred_check
          %p221 = pneg %p147
        $region30: #{tpu_custom_call.1} parent=11 // pred_check_branch
          %223 = sbr.rel (%p221) target = $region32
        $region31: #{tpu_custom_call.1} parent=11 // pred_region
          _
        $region32: #{tpu_custom_call.1} parent=11 // pred_fallthru
          _
        // Predicated region
        $region33: #{tpu_custom_call.1} parent=11 // pred_check
          %p224 = pneg %p168
        $region34: #{tpu_custom_call.1} parent=11 // pred_check_branch
          %226 = sbr.rel (%p224) target = $region36
        $region35: #{tpu_custom_call.1} parent=11 // pred_region
          _
        $region36: #{tpu_custom_call.1} parent=11 // pred_fallthru
          _
      $region12: #{tpu_custom_call.1} parent=5 // pred_fallthru
        _
      %p227 = scmp.lt.s32.totalorder %s16, 2
      // Predicated region
      $region37: #{tpu_custom_call.1} parent=5 // pred_check
        %p228 = pneg %p227
      $region38: #{tpu_custom_call.1} parent=5 // pred_check_branch
        %230 = sbr.rel (%p228) target = $region40
      $region39: #{tpu_custom_call.1} parent=5 // pred_region
        // Predicated region
        $region41: #{tpu_custom_call.1} parent=39 // pred_check
          %p231 = pneg %p36
        $region42: #{tpu_custom_call.1} parent=39 // pred_check_branch
          %233 = sbr.rel (%p231) target = $region44
        $region43: #{tpu_custom_call.1} parent=39 // pred_region
          %s234 = sand.u32 %s26, 1
          %s235 = sand.u32 %s26, 1
          %s236 = smul.addr %s235, 24
          %s237 = scalar_lea.vmem [#allocation2], %s236
          %s238 = smul.addr %s16, 8
          %s239 = scalar_lea.vmem %s0, %s238
          // Predicated region
          $region45: #{tpu_custom_call.1} parent=43 // pred_check
            _
          $region46: #{tpu_custom_call.1} parent=43 // pred_check_branch
            %241 = sbr.rel (0) target = $region48
          $region47: #{tpu_custom_call.1} parent=43 // pred_region
            // Predicated region
            $region49: #{tpu_custom_call.1} parent=47 // pred_check
              _
            $region50: #{tpu_custom_call.1} parent=47 // pred_check_branch
              %243 = sbr.rel (0) target = $region52
            $region51: #{tpu_custom_call.1} parent=47 // pred_region
              // Predicated region
              $region64: #{tpu_custom_call.1} parent=51 // pred_check
                _
              $region65: #{tpu_custom_call.1} parent=51 // pred_check_branch
                %262 = sbr.rel (0) target = $region67
              $region66: #{tpu_custom_call.1} parent=51 // pred_region
                loop: start=0, step=1, limit=1
                $region68: #{tpu_custom_call.1} parent=66 // loop_pre_header
                  _
                $region69: #{tpu_custom_call.1} parent=66 // loop_header
                  %s264 = sphi 0, %s268
                  %p265 = scmp.ge.s32.totalorder %s264, 1
                  %s269 = sphi %s239, %s239
                  %s270 = sphi %s237, %s237
                $region70: #{tpu_custom_call.1} parent=66 // loop_header_branch
                  %267 = sbr.rel (%p265) target = $region74
                $region71: #{tpu_custom_call.1} parent=66 // loop_body
                  %v271 = vld [vmem:[%s269] sm:$0xff]
                  %272 = vst [vmem:[%s270] sm:$0xff] %v271
                  %v273 = vld [vmem:[%s269 + $0x10] sm:$0xff]
                  %274 = vst [vmem:[%s270 + $0x8] sm:$0xff] %v273
                  %v275 = vld [vmem:[%s269 + $0x20] sm:$0xff]
                  %276 = vst [vmem:[%s270 + $0x10] sm:$0xff] %v275
                $region72: #{tpu_custom_call.1} parent=66 // loop_footer
                  %s268 = sadd.s32 1, %s264
                $region73: #{tpu_custom_call.1} parent=66 // loop_footer_branch
                  %263 = sbr.rel target = $region69
                $region74: #{tpu_custom_call.1} parent=66 // loop_exit
                  _
              $region67: #{tpu_custom_call.1} parent=51 // pred_fallthru
                _
              // Predicated region
              $region75: #{tpu_custom_call.1} parent=51 // pred_check
                _
              $region76: #{tpu_custom_call.1} parent=51 // pred_check_branch
                %278 = sbr.rel target = $region78
              $region77: #{tpu_custom_call.1} parent=51 // pred_region
                _
              $region78: #{tpu_custom_call.1} parent=51 // pred_fallthru
                _
            $region52: #{tpu_custom_call.1} parent=47 // pred_fallthru
              _
            // Predicated region
            $region53: #{tpu_custom_call.1} parent=47 // pred_check
              _
            $region54: #{tpu_custom_call.1} parent=47 // pred_check_branch
              %245 = sbr.rel target = $region56
            $region55: #{tpu_custom_call.1} parent=47 // pred_region
              loop: start=0, step=1, limit=1
              $region57: #{tpu_custom_call.1} parent=55 // loop_pre_header
                _
              $region58: #{tpu_custom_call.1} parent=55 // loop_header
                %s248 = sphi 0, %s252
                %p249 = scmp.ge.s32.totalorder %s248, 1
                %s253 = sphi %s239, %s239
                %s254 = sphi %s237, %s237
              $region59: #{tpu_custom_call.1} parent=55 // loop_header_branch
                %251 = sbr.rel (%p249) target = $region63
              $region60: #{tpu_custom_call.1} parent=55 // loop_body
                %v255 = vld [vmem:[%s253] sm:$0xff]
                %256 = vst [vmem:[%s254] sm:$0xff] %v255
                %v257 = vld [vmem:[%s253 + $0x10] sm:$0xff]
                %258 = vst [vmem:[%s254 + $0x8] sm:$0xff] %v257
                %v259 = vld [vmem:[%s253 + $0x20] sm:$0xff]
                %260 = vst [vmem:[%s254 + $0x10] sm:$0xff] %v259
              $region61: #{tpu_custom_call.1} parent=55 // loop_footer
                %s252 = sadd.s32 1, %s248
              $region62: #{tpu_custom_call.1} parent=55 // loop_footer_branch
                %247 = sbr.rel target = $region58
              $region63: #{tpu_custom_call.1} parent=55 // loop_exit
                _
            $region56: #{tpu_custom_call.1} parent=47 // pred_fallthru
              _
          $region48: #{tpu_custom_call.1} parent=43 // pred_fallthru
            _
          %279 = vnop
        $region44: #{tpu_custom_call.1} parent=39 // pred_fallthru
          _
      $region40: #{tpu_custom_call.1} parent=5 // pred_fallthru
        _
      %p280 = scmp.le.s32.totalorder 1, %s16
      %p281 = scmp.lt.s32.totalorder %s16, 3
      %p282 = pnand %p280, %p281
      %p283 = pneg %p282
      // Predicated region
      $region79: #{tpu_custom_call.1} parent=5 // pred_check
        _
      $region80: #{tpu_custom_call.1} parent=5 // pred_check_branch
        %285 = sbr.rel (%p282) target = $region82
      $region81: #{tpu_custom_call.1} parent=5 // pred_region
        %s286 = ssub.s32 %s16, 1
        %s287 = sand.u32 %s29, 1
        %s288 = sand.u32 %s29, 1
        %s289 = smul.addr %s288, 24
        %s290 = scalar_lea.vmem [#allocation2], %s289
        // Predicated region
        $region83: #{tpu_custom_call.1} parent=81 // pred_check
          %p291 = pneg %p42
        $region84: #{tpu_custom_call.1} parent=81 // pred_check_branch
          %293 = sbr.rel (%p291) target = $region86
        $region85: #{tpu_custom_call.1} parent=81 // pred_region
          _
        $region86: #{tpu_custom_call.1} parent=81 // pred_fallthru
          _
        %s294 = sand.u32 %s29, 1
        %s295 = sand.u32 %s29, 1
        %s296 = smul.addr %s295, 24
        %s297 = scalar_lea.vmem [#allocation2], %s296
        %p298 = pneg %p42
        %p299 = pneg %p39
        %p300 = pneg %p63
        %p301 = pneg %p60
        %p302 = pneg %p84
        %p303 = pneg %p81
        %p304 = pneg %p105
        %p305 = pneg %p102
        %p306 = pneg %p126
        %p307 = pneg %p123
        %p308 = pneg %p147
        %p309 = pneg %p144
        %p310 = pneg %p168
        %p311 = pneg %p165
        %p312 = pneg %p194
        %p313 = pneg %p191
        %s314 = sand.u32 %s181, 1
        %s315 = scalar_lea.sflag [#allocation4], %s314
        %s316 = sand.u32 %s181, 1
        %s317 = smul.addr %s316, 16
        %s318 = scalar_lea.vmem [#allocation3], %s317
        %v319 = vld [vmem:[%s290] sm:$0xff]
        %v320 = vld [vmem:[%s290 + $0x8] sm:$0xff]
        %v321 = vld [vmem:[%s290 + $0x10] sm:$0xff]
        %v322 = vld [vmem:[%s1] sm:$0xff]
        %v323 = vld [vmem:[%s1 + $0x8] sm:$0xff]
        %v324 = vld [vmem:[%s1 + $0x10] sm:$0xff]
        %v325 = vld [vmem:[%s1 + $0x18] sm:$0xff]
        %v326 = vld [vmem:[%s1 + $0x20] sm:$0xff]
        %v327 = vld [vmem:[%s1 + $0x28] sm:$0xff]
        %v328 = vld [vmem:[%s1 + $0x30] sm:$0xff]
        %v329 = vld [vmem:[%s1 + $0x38] sm:$0xff]
        %v330 = vld [vmem:[%s1 + $0x40] sm:$0xff]
        %v331 = vld [vmem:[%s1 + $0x48] sm:$0xff]
        %v332 = vld [vmem:[%s1 + $0x50] sm:$0xff]
        %v333 = vld [vmem:[%s1 + $0x58] sm:$0xff]
        %v334 = vld [vmem:[%s1 + $0x60] sm:$0xff]
        %v335 = vld [vmem:[%s1 + $0x68] sm:$0xff]
        %v336 = vld [vmem:[%s1 + $0x70] sm:$0xff]
        %v337 = vld [vmem:[%s1 + $0x78] sm:$0xff]
        %v338 = vld [vmem:[%s2] sm:$0xff]
        %v339 = vld [vmem:[%s2 + $0x8] sm:$0xff]
        %v340 = vld [vmem:[%s2 + $0x10] sm:$0xff]
        %v341 = vld [vmem:[%s2 + $0x18] sm:$0xff]
        %v342 = vld [vmem:[%s2 + $0x20] sm:$0xff]
        %v343 = vld [vmem:[%s2 + $0x28] sm:$0xff]
        %v344 = vld [vmem:[%s2 + $0x30] sm:$0xff]
        %v345 = vld [vmem:[%s2 + $0x38] sm:$0xff]
        %v346 = vld [vmem:[%s2 + $0x40] sm:$0xff]
        %v347 = vld [vmem:[%s2 + $0x48] sm:$0xff]
        %v348 = vld [vmem:[%s2 + $0x50] sm:$0xff]
        %v349 = vld [vmem:[%s2 + $0x58] sm:$0xff]
        %v350 = vld [vmem:[%s2 + $0x60] sm:$0xff]
        %v351 = vld [vmem:[%s2 + $0x68] sm:$0xff]
        %v352 = vld [vmem:[%s2 + $0x70] sm:$0xff]
        %v353 = vld [vmem:[%s2 + $0x78] sm:$0xff]
        %355 = vset.pattern.permute.xlu0 0
        %356 = vperm.xlu0 %355, %v338
        %v357 = vpop.permute.xlu0 %356
        %360 = vset.pattern.permute.xlu0 0
        %361 = vperm.xlu0 %360, %v339
        %v362 = vpop.permute.xlu0 %361
        %365 = vset.pattern.permute.xlu0 0
        %366 = vperm.xlu0 %365, %v340
        %v367 = vpop.permute.xlu0 %366
        %370 = vset.pattern.permute.xlu0 0
        %371 = vperm.xlu0 %370, %v341
        %v372 = vpop.permute.xlu0 %371
        %375 = vset.pattern.permute.xlu0 0
        %376 = vperm.xlu0 %375, %v342
        %v377 = vpop.permute.xlu0 %376
        %380 = vset.pattern.permute.xlu0 0
        %381 = vperm.xlu0 %380, %v343
        %v382 = vpop.permute.xlu0 %381
        %385 = vset.pattern.permute.xlu0 0
        %386 = vperm.xlu0 %385, %v344
        %v387 = vpop.permute.xlu0 %386
        %390 = vset.pattern.permute.xlu0 0
        %391 = vperm.xlu0 %390, %v345
        %v392 = vpop.permute.xlu0 %391
        %395 = vset.pattern.permute.xlu0 0
        %396 = vperm.xlu0 %395, %v346
        %v397 = vpop.permute.xlu0 %396
        %400 = vset.pattern.permute.xlu0 0
        %401 = vperm.xlu0 %400, %v347
        %v402 = vpop.permute.xlu0 %401
        %405 = vset.pattern.permute.xlu0 0
        %406 = vperm.xlu0 %405, %v348
        %v407 = vpop.permute.xlu0 %406
        %410 = vset.pattern.permute.xlu0 0
        %411 = vperm.xlu0 %410, %v349
        %v412 = vpop.permute.xlu0 %411
        %415 = vset.pattern.permute.xlu0 0
        %416 = vperm.xlu0 %415, %v350
        %v417 = vpop.permute.xlu0 %416
        %420 = vset.pattern.permute.xlu0 0
        %421 = vperm.xlu0 %420, %v351
        %v422 = vpop.permute.xlu0 %421
        %425 = vset.pattern.permute.xlu0 0
        %426 = vperm.xlu0 %425, %v352
        %v427 = vpop.permute.xlu0 %426
        %430 = vset.pattern.permute.xlu0 0
        %431 = vperm.xlu0 %430, %v353
        %v432 = vpop.permute.xlu0 %431
        %vm434 = vcmask 195584
        %v436 = vsel %vm434, %v322, 0
        %v439 = vsel %vm434, %v323, 0
        %v442 = vsel %vm434, %v324, 0
        %v445 = vsel %vm434, %v325, 0
        %v448 = vsel %vm434, %v326, 0
        %v451 = vsel %vm434, %v327, 0
        %v454 = vsel %vm434, %v328, 0
        %v457 = vsel %vm434, %v329, 0
        %v460 = vsel %vm434, %v330, 0
        %v463 = vsel %vm434, %v331, 0
        %v466 = vsel %vm434, %v332, 0
        %v469 = vsel %vm434, %v333, 0
        %v472 = vsel %vm434, %v334, 0
        %v475 = vsel %vm434, %v335, 0
        %v478 = vsel %vm434, %v336, 0
        %v481 = vsel %vm434, %v337, 0
        %483 = vmatprep.subr.mxu0 0.0
        %484 = vmatpush1.msra.mxu0 %v319
        %485 = vmatprep.subr.mxu0 0.0
        %486 = vmatpush1.msra.mxu0 %v320
        %487 = vmatprep.subr.mxu0 0.0
        %488 = vmatpush1.msra.mxu0 %v321
        %489 = vmatprep.subr.mxu0 0.0
        %490 = vmatpush1.msra.mxu0 0.0
        %491 = vmatprep.subr.mxu0 0.0
        %492 = vmatpush1.msra.mxu0 0.0
        %493 = vmatprep.subr.mxu0 0.0
        %494 = vmatpush1.msra.mxu0 0.0
        %495 = vmatprep.subr.mxu0 0.0
        %496 = vmatpush1.msra.mxu0 0.0
        %497 = vmatprep.subr.mxu0 0.0
        %498 = vmatpush1.msra.mxu0 0.0
        %499 = vmatprep.subr.mxu0 0.0
        %500 = vmatpush1.msra.mxu0 0.0
        %501 = vmatprep.subr.mxu0 0.0
        %502 = vmatpush1.msra.mxu0 0.0
        %503 = vmatprep.subr.mxu0 0.0
        %504 = vmatpush1.msra.mxu0 0.0
        %505 = vmatprep.subr.mxu0 0.0
        %506 = vmatpush1.msra.mxu0 0.0
        %507 = vmatprep.subr.mxu0 0.0
        %508 = vmatpush1.msra.mxu0 0.0
        %509 = vmatprep.subr.mxu0 0.0
        %510 = vmatpush1.msra.mxu0 0.0
        %511 = vmatprep.subr.mxu0 0.0
        %512 = vmatpush1.msra.mxu0 0.0
        %513 = vmatprep.subr.mxu0 0.0
        %514 = vmatpush1.msra.mxu0 0.0
        %515 = vmatprep.subr.mxu0 0.0
        %516 = vmatpush1.msra.mxu0 0.0
        %517 = vmatprep.subr.mxu0 0.0
        %518 = vmatpush1.msra.mxu0 0.0
        %519 = vmatprep.subr.mxu0 0.0
        %520 = vmatpush1.msra.mxu0 0.0
        %521 = vmatprep.subr.mxu0 0.0
        %522 = vmatpush1.msra.mxu0 0.0
        %523 = vmatprep.subr.mxu0 0.0
        %524 = vmatpush1.msra.mxu0 0.0
        %525 = vmatprep.subr.mxu0 0.0
        %526 = vmatpush1.msra.mxu0 0.0
        %527 = vmatprep.subr.mxu0 0.0
        %528 = vmatpush1.msra.mxu0 0.0
        %529 = vmatprep.subr.mxu0 0.0
        %530 = vmatpush1.msra.mxu0 0.0
        %531 = vmatprep.subr.mxu0 0.0
        %532 = vmatpush1.msra.mxu0 0.0
        %533 = vmatprep.subr.mxu0 0.0
        %534 = vmatpush1.msra.mxu0 0.0
        %535 = vmatprep.subr.mxu0 0.0
        %536 = vmatpush1.msra.mxu0 0.0
        %537 = vmatprep.subr.mxu0 0.0
        %538 = vmatpush1.msra.mxu0 0.0
        %539 = vmatprep.subr.mxu0 0.0
        %540 = vmatpush1.msra.mxu0 0.0
        %541 = vmatprep.subr.mxu0 0.0
        %542 = vmatpush1.msra.mxu0 0.0
        %543 = vmatprep.subr.mxu0 0.0
        %544 = vmatpush1.msra.mxu0 0.0
        %545 = vmatprep.subr.mxu0 0.0
        %546 = vmatpush1.msra.mxu0 0.0
        %547 = vmatprep.mubr.f32.mxu0 0.0
        %548 = vmatmul.mubr.f32.gmra.mrb[0].mxu0 %v436
        %v549 = vpop.f32.mrb[0].mxu0
        %v550 = vadd.f32 %v357, %v549
        %v551 = vpop.f32.mrb[0].mxu0
        %552 = vmatprep.mubr.f32.mxu0 0.0
        %553 = vmatmul.mubr.f32.gmra.mrb[0].mxu0 %v439
        %v554 = vpop.f32.mrb[0].mxu0
        %v555 = vadd.f32 %v362, %v554
        %v556 = vpop.f32.mrb[0].mxu0
        %557 = vmatprep.mubr.f32.mxu0 0.0
        %558 = vmatmul.mubr.f32.gmra.mrb[0].mxu0 %v442
        %v559 = vpop.f32.mrb[0].mxu0
        %v560 = vadd.f32 %v367, %v559
        %v561 = vpop.f32.mrb[0].mxu0
        %562 = vmatprep.mubr.f32.mxu0 0.0
        %563 = vmatmul.mubr.f32.gmra.mrb[0].mxu0 %v445
        %v564 = vpop.f32.mrb[0].mxu0
        %v565 = vadd.f32 %v372, %v564
        %v566 = vpop.f32.mrb[0].mxu0
        %567 = vmatprep.mubr.f32.mxu0 0.0
        %568 = vmatmul.mubr.f32.gmra.mrb[0].mxu0 %v448
        %v569 = vpop.f32.mrb[0].mxu0
        %v570 = vadd.f32 %v377, %v569
        %v571 = vpop.f32.mrb[0].mxu0
        %572 = vmatprep.mubr.f32.mxu0 0.0
        %573 = vmatmul.mubr.f32.gmra.mrb[0].mxu0 %v451
        %v574 = vpop.f32.mrb[0].mxu0
        %v575 = vadd.f32 %v382, %v574
        %v576 = vpop.f32.mrb[0].mxu0
        %577 = vmatprep.mubr.f32.mxu0 0.0
        %578 = vmatmul.mubr.f32.gmra.mrb[0].mxu0 %v454
        %v579 = vpop.f32.mrb[0].mxu0
        %v580 = vadd.f32 %v387, %v579
        %v581 = vpop.f32.mrb[0].mxu0
        %582 = vmatprep.mubr.f32.mxu0 0.0
        %583 = vmatmul.mubr.f32.gmra.mrb[0].mxu0 %v457
        %v584 = vpop.f32.mrb[0].mxu0
        %v585 = vadd.f32 %v392, %v584
        %v586 = vpop.f32.mrb[0].mxu0
        %587 = vmatprep.mubr.f32.mxu0 0.0
        %588 = vmatmul.mubr.f32.gmra.mrb[0].mxu0 %v460
        %v589 = vpop.f32.mrb[0].mxu0
        %v590 = vadd.f32 %v397, %v589
        %v591 = vpop.f32.mrb[0].mxu0
        %592 = vmatprep.mubr.f32.mxu0 0.0
        %593 = vmatmul.mubr.f32.gmra.mrb[0].mxu0 %v463
        %v594 = vpop.f32.mrb[0].mxu0
        %v595 = vadd.f32 %v402, %v594
        %v596 = vpop.f32.mrb[0].mxu0
        %597 = vmatprep.mubr.f32.mxu0 0.0
        %598 = vmatmul.mubr.f32.gmra.mrb[0].mxu0 %v466
        %v599 = vpop.f32.mrb[0].mxu0
        %v600 = vadd.f32 %v407, %v599
        %v601 = vpop.f32.mrb[0].mxu0
        %602 = vmatprep.mubr.f32.mxu0 0.0
        %603 = vmatmul.mubr.f32.gmra.mrb[0].mxu0 %v469
        %v604 = vpop.f32.mrb[0].mxu0
        %v605 = vadd.f32 %v412, %v604
        %v606 = vpop.f32.mrb[0].mxu0
        %607 = vmatprep.mubr.f32.mxu0 0.0
        %608 = vmatmul.mubr.f32.gmra.mrb[0].mxu0 %v472
        %v609 = vpop.f32.mrb[0].mxu0
        %v610 = vadd.f32 %v417, %v609
        %v611 = vpop.f32.mrb[0].mxu0
        %612 = vmatprep.mubr.f32.mxu0 0.0
        %613 = vmatmul.mubr.f32.gmra.mrb[0].mxu0 %v475
        %v614 = vpop.f32.mrb[0].mxu0
        %v615 = vadd.f32 %v422, %v614
        %v616 = vpop.f32.mrb[0].mxu0
        %617 = vmatprep.mubr.f32.mxu0 0.0
        %618 = vmatmul.mubr.f32.gmra.mrb[0].mxu0 %v478
        %v619 = vpop.f32.mrb[0].mxu0
        %v620 = vadd.f32 %v427, %v619
        %v621 = vpop.f32.mrb[0].mxu0
        %622 = vmatprep.mubr.f32.mxu0 0.0
        %623 = vmatmul.mubr.f32.gmra.mrb[0].mxu0 %v481
        %v624 = vpop.f32.mrb[0].mxu0
        %v625 = vadd.f32 %v432, %v624
        %v626 = vpop.f32.mrb[0].mxu0
        %627 = vdwg.mxu0
        %v628 = vmax.f32 %v550, 0.0
        %v629 = vmax.f32 %v555, 0.0
        %v630 = vmax.f32 %v560, 0.0
        %v631 = vmax.f32 %v565, 0.0
        %v632 = vmax.f32 %v570, 0.0
        %v633 = vmax.f32 %v575, 0.0
        %v634 = vmax.f32 %v580, 0.0
        %v635 = vmax.f32 %v585, 0.0
        %v636 = vmax.f32 %v590, 0.0
        %v637 = vmax.f32 %v595, 0.0
        %v638 = vmax.f32 %v600, 0.0
        %v639 = vmax.f32 %v605, 0.0
        %v640 = vmax.f32 %v610, 0.0
        %v641 = vmax.f32 %v615, 0.0
        %v642 = vmax.f32 %v620, 0.0
        %v643 = vmax.f32 %v625, 0.0
        %v644 = vld [vmem:[%s3] sm:$0xff]
        %v645 = vld [vmem:[%s3 + $0x8] sm:$0xff]
        %v646 = vld [vmem:[%s3 + $0x10] sm:$0xff]
        %v647 = vld [vmem:[%s3 + $0x18] sm:$0xff]
        %v648 = vld [vmem:[%s3 + $0x20] sm:$0xff]
        %v649 = vld [vmem:[%s3 + $0x28] sm:$0xff]
        %v650 = vld [vmem:[%s3 + $0x30] sm:$0xff]
        %v651 = vld [vmem:[%s3 + $0x38] sm:$0xff]
        %v652 = vld [vmem:[%s3 + $0x40] sm:$0xff]
        %v653 = vld [vmem:[%s3 + $0x48] sm:$0xff]
        %v654 = vld [vmem:[%s3 + $0x50] sm:$0xff]
        %v655 = vld [vmem:[%s3 + $0x58] sm:$0xff]
        %v656 = vld [vmem:[%s3 + $0x60] sm:$0xff]
        %v657 = vld [vmem:[%s3 + $0x68] sm:$0xff]
        %v658 = vld [vmem:[%s3 + $0x70] sm:$0xff]
        %v659 = vld [vmem:[%s3 + $0x78] sm:$0xff]
        %v660 = vld [vmem:[%s4] sm:$0xff]
        %v661 = vld [vmem:[%s4 + $0x8] sm:$0xff]
        %v662 = vld [vmem:[%s4 + $0x10] sm:$0xff]
        %v663 = vld [vmem:[%s4 + $0x18] sm:$0xff]
        %v664 = vld [vmem:[%s4 + $0x20] sm:$0xff]
        %v665 = vld [vmem:[%s4 + $0x28] sm:$0xff]
        %v666 = vld [vmem:[%s4 + $0x30] sm:$0xff]
        %v667 = vld [vmem:[%s4 + $0x38] sm:$0xff]
        %v668 = vld [vmem:[%s4 + $0x40] sm:$0xff]
        %v669 = vld [vmem:[%s4 + $0x48] sm:$0xff]
        %v670 = vld [vmem:[%s4 + $0x50] sm:$0xff]
        %v671 = vld [vmem:[%s4 + $0x58] sm:$0xff]
        %v672 = vld [vmem:[%s4 + $0x60] sm:$0xff]
        %v673 = vld [vmem:[%s4 + $0x68] sm:$0xff]
        %v674 = vld [vmem:[%s4 + $0x70] sm:$0xff]
        %v675 = vld [vmem:[%s4 + $0x78] sm:$0xff]
        %677 = vset.pattern.permute.xlu0 0
        %678 = vperm.xlu0 %677, %v660
        %v679 = vpop.permute.xlu0 %678
        %682 = vset.pattern.permute.xlu0 0
        %683 = vperm.xlu0 %682, %v661
        %v684 = vpop.permute.xlu0 %683
        %687 = vset.pattern.permute.xlu0 0
        %688 = vperm.xlu0 %687, %v662
        %v689 = vpop.permute.xlu0 %688
        %692 = vset.pattern.permute.xlu0 0
        %693 = vperm.xlu0 %692, %v663
        %v694 = vpop.permute.xlu0 %693
        %697 = vset.pattern.permute.xlu0 0
        %698 = vperm.xlu0 %697, %v664
        %v699 = vpop.permute.xlu0 %698
        %702 = vset.pattern.permute.xlu0 0
        %703 = vperm.xlu0 %702, %v665
        %v704 = vpop.permute.xlu0 %703
        %707 = vset.pattern.permute.xlu0 0
        %708 = vperm.xlu0 %707, %v666
        %v709 = vpop.permute.xlu0 %708
        %712 = vset.pattern.permute.xlu0 0
        %713 = vperm.xlu0 %712, %v667
        %v714 = vpop.permute.xlu0 %713
        %717 = vset.pattern.permute.xlu0 0
        %718 = vperm.xlu0 %717, %v668
        %v719 = vpop.permute.xlu0 %718
        %722 = vset.pattern.permute.xlu0 0
        %723 = vperm.xlu0 %722, %v669
        %v724 = vpop.permute.xlu0 %723
        %727 = vset.pattern.permute.xlu0 0
        %728 = vperm.xlu0 %727, %v670
        %v729 = vpop.permute.xlu0 %728
        %732 = vset.pattern.permute.xlu0 0
        %733 = vperm.xlu0 %732, %v671
        %v734 = vpop.permute.xlu0 %733
        %737 = vset.pattern.permute.xlu0 0
        %738 = vperm.xlu0 %737, %v672
        %v739 = vpop.permute.xlu0 %738
        %742 = vset.pattern.permute.xlu0 0
        %743 = vperm.xlu0 %742, %v673
        %v744 = vpop.permute.xlu0 %743
        %747 = vset.pattern.permute.xlu0 0
        %748 = vperm.xlu0 %747, %v674
        %v749 = vpop.permute.xlu0 %748
        %752 = vset.pattern.permute.xlu0 0
        %753 = vperm.xlu0 %752, %v675
        %v754 = vpop.permute.xlu0 %753
        %756 = vmatprep.subr.mxu0 0.0
        %757 = vmatpush1.msra.mxu0 %v628
        %758 = vmatprep.subr.mxu0 0.0
        %759 = vmatpush1.msra.mxu0 %v629
        %760 = vmatprep.subr.mxu0 0.0
        %761 = vmatpush1.msra.mxu0 %v630
        %762 = vmatprep.subr.mxu0 0.0
        %763 = vmatpush1.msra.mxu0 %v631
        %764 = vmatprep.subr.mxu0 0.0
        %765 = vmatpush1.msra.mxu0 %v632
        %766 = vmatprep.subr.mxu0 0.0
        %767 = vmatpush1.msra.mxu0 %v633
        %768 = vmatprep.subr.mxu0 0.0
        %769 = vmatpush1.msra.mxu0 %v634
        %770 = vmatprep.subr.mxu0 0.0
        %771 = vmatpush1.msra.mxu0 %v635
        %772 = vmatprep.subr.mxu0 0.0
        %773 = vmatpush1.msra.mxu0 %v636
        %774 = vmatprep.subr.mxu0 0.0
        %775 = vmatpush1.msra.mxu0 %v637
        %776 = vmatprep.subr.mxu0 0.0
        %777 = vmatpush1.msra.mxu0 %v638
        %778 = vmatprep.subr.mxu0 0.0
        %779 = vmatpush1.msra.mxu0 %v639
        %780 = vmatprep.subr.mxu0 0.0
        %781 = vmatpush1.msra.mxu0 %v640
        %782 = vmatprep.subr.mxu0 0.0
        %783 = vmatpush1.msra.mxu0 %v641
        %784 = vmatprep.subr.mxu0 0.0
        %785 = vmatpush1.msra.mxu0 %v642
        %786 = vmatprep.subr.mxu0 0.0
        %787 = vmatpush1.msra.mxu0 %v643
        %788 = vmatprep.subr.mxu0 0.0
        %789 = vmatpush1.msra.mxu0 0.0
        %790 = vmatprep.subr.mxu0 0.0
        %791 = vmatpush1.msra.mxu0 0.0
        %792 = vmatprep.subr.mxu0 0.0
        %793 = vmatpush1.msra.mxu0 0.0
        %794 = vmatprep.subr.mxu0 0.0
        %795 = vmatpush1.msra.mxu0 0.0
        %796 = vmatprep.subr.mxu0 0.0
        %797 = vmatpush1.msra.mxu0 0.0
        %798 = vmatprep.subr.mxu0 0.0
        %799 = vmatpush1.msra.mxu0 0.0
        %800 = vmatprep.subr.mxu0 0.0
        %801 = vmatpush1.msra.mxu0 0.0
        %802 = vmatprep.subr.mxu0 0.0
        %803 = vmatpush1.msra.mxu0 0.0
        %804 = vmatprep.subr.mxu0 0.0
        %805 = vmatpush1.msra.mxu0 0.0
        %806 = vmatprep.subr.mxu0 0.0
        %807 = vmatpush1.msra.mxu0 0.0
        %808 = vmatprep.subr.mxu0 0.0
        %809 = vmatpush1.msra.mxu0 0.0
        %810 = vmatprep.subr.mxu0 0.0
        %811 = vmatpush1.msra.mxu0 0.0
        %812 = vmatprep.subr.mxu0 0.0
        %813 = vmatpush1.msra.mxu0 0.0
        %814 = vmatprep.subr.mxu0 0.0
        %815 = vmatpush1.msra.mxu0 0.0
        %816 = vmatprep.subr.mxu0 0.0
        %817 = vmatpush1.msra.mxu0 0.0
        %818 = vmatprep.subr.mxu0 0.0
        %819 = vmatpush1.msra.mxu0 0.0
        %820 = vmatprep.mubr.f32.mxu0 0.0
        %821 = vmatmul.mubr.f32.gmra.mrb[0].mxu0 %v644
        %v822 = vpop.f32.mrb[0].mxu0
        %v823 = vadd.f32 %v679, %v822
        %v824 = vpop.f32.mrb[0].mxu0
        %825 = vmatprep.mubr.f32.mxu0 0.0
        %826 = vmatmul.mubr.f32.gmra.mrb[0].mxu0 %v645
        %v827 = vpop.f32.mrb[0].mxu0
        %v828 = vadd.f32 %v684, %v827
        %v829 = vpop.f32.mrb[0].mxu0
        %830 = vmatprep.mubr.f32.mxu0 0.0
        %831 = vmatmul.mubr.f32.gmra.mrb[0].mxu0 %v646
        %v832 = vpop.f32.mrb[0].mxu0
        %v833 = vadd.f32 %v689, %v832
        %v834 = vpop.f32.mrb[0].mxu0
        %835 = vmatprep.mubr.f32.mxu0 0.0
        %836 = vmatmul.mubr.f32.gmra.mrb[0].mxu0 %v647
        %v837 = vpop.f32.mrb[0].mxu0
        %v838 = vadd.f32 %v694, %v837
        %v839 = vpop.f32.mrb[0].mxu0
        %840 = vmatprep.mubr.f32.mxu0 0.0
        %841 = vmatmul.mubr.f32.gmra.mrb[0].mxu0 %v648
        %v842 = vpop.f32.mrb[0].mxu0
        %v843 = vadd.f32 %v699, %v842
        %v844 = vpop.f32.mrb[0].mxu0
        %845 = vmatprep.mubr.f32.mxu0 0.0
        %846 = vmatmul.mubr.f32.gmra.mrb[0].mxu0 %v649
        %v847 = vpop.f32.mrb[0].mxu0
        %v848 = vadd.f32 %v704, %v847
        %v849 = vpop.f32.mrb[0].mxu0
        %850 = vmatprep.mubr.f32.mxu0 0.0
        %851 = vmatmul.mubr.f32.gmra.mrb[0].mxu0 %v650
        %v852 = vpop.f32.mrb[0].mxu0
        %v853 = vadd.f32 %v709, %v852
        %v854 = vpop.f32.mrb[0].mxu0
        %855 = vmatprep.mubr.f32.mxu0 0.0
        %856 = vmatmul.mubr.f32.gmra.mrb[0].mxu0 %v651
        %v857 = vpop.f32.mrb[0].mxu0
        %v858 = vadd.f32 %v714, %v857
        %v859 = vpop.f32.mrb[0].mxu0
        %860 = vmatprep.mubr.f32.mxu0 0.0
        %861 = vmatmul.mubr.f32.gmra.mrb[0].mxu0 %v652
        %v862 = vpop.f32.mrb[0].mxu0
        %v863 = vadd.f32 %v719, %v862
        %v864 = vpop.f32.mrb[0].mxu0
        %865 = vmatprep.mubr.f32.mxu0 0.0
        %866 = vmatmul.mubr.f32.gmra.mrb[0].mxu0 %v653
        %v867 = vpop.f32.mrb[0].mxu0
        %v868 = vadd.f32 %v724, %v867
        %v869 = vpop.f32.mrb[0].mxu0
        %870 = vmatprep.mubr.f32.mxu0 0.0
        %871 = vmatmul.mubr.f32.gmra.mrb[0].mxu0 %v654
        %v872 = vpop.f32.mrb[0].mxu0
        %v873 = vadd.f32 %v729, %v872
        %v874 = vpop.f32.mrb[0].mxu0
        %875 = vmatprep.mubr.f32.mxu0 0.0
        %876 = vmatmul.mubr.f32.gmra.mrb[0].mxu0 %v655
        %v877 = vpop.f32.mrb[0].mxu0
        %v878 = vadd.f32 %v734, %v877
        %v879 = vpop.f32.mrb[0].mxu0
        %880 = vmatprep.mubr.f32.mxu0 0.0
        %881 = vmatmul.mubr.f32.gmra.mrb[0].mxu0 %v656
        %v882 = vpop.f32.mrb[0].mxu0
        %v883 = vadd.f32 %v739, %v882
        %v884 = vpop.f32.mrb[0].mxu0
        %885 = vmatprep.mubr.f32.mxu0 0.0
        %886 = vmatmul.mubr.f32.gmra.mrb[0].mxu0 %v657
        %v887 = vpop.f32.mrb[0].mxu0
        %v888 = vadd.f32 %v744, %v887
        %v889 = vpop.f32.mrb[0].mxu0
        %890 = vmatprep.mubr.f32.mxu0 0.0
        %891 = vmatmul.mubr.f32.gmra.mrb[0].mxu0 %v658
        %v892 = vpop.f32.mrb[0].mxu0
        %v893 = vadd.f32 %v749, %v892
        %v894 = vpop.f32.mrb[0].mxu0
        %895 = vmatprep.mubr.f32.mxu0 0.0
        %896 = vmatmul.mubr.f32.gmra.mrb[0].mxu0 %v659
        %v897 = vpop.f32.mrb[0].mxu0
        %v898 = vadd.f32 %v754, %v897
        %v899 = vpop.f32.mrb[0].mxu0
        %900 = vdwg.mxu0
        %v901 = vmax.f32 %v823, 0.0
        %v902 = vmax.f32 %v828, 0.0
        %v903 = vmax.f32 %v833, 0.0
        %v904 = vmax.f32 %v838, 0.0
        %v905 = vmax.f32 %v843, 0.0
        %v906 = vmax.f32 %v848, 0.0
        %v907 = vmax.f32 %v853, 0.0
        %v908 = vmax.f32 %v858, 0.0
        %v909 = vmax.f32 %v863, 0.0
        %v910 = vmax.f32 %v868, 0.0
        %v911 = vmax.f32 %v873, 0.0
        %v912 = vmax.f32 %v878, 0.0
        %v913 = vmax.f32 %v883, 0.0
        %v914 = vmax.f32 %v888, 0.0
        %v915 = vmax.f32 %v893, 0.0
        %v916 = vmax.f32 %v898, 0.0
        %v917 = vld [vmem:[%s5] sm:$0xff]
        %v918 = vld [vmem:[%s5 + $0x8] sm:$0xff]
        %v919 = vld [vmem:[%s6] sm:$0xff]
        %v920 = vld [vmem:[%s6 + $0x8] sm:$0xff]
        %922 = vset.pattern.permute.xlu0 0
        %923 = vperm.xlu0 %922, %v919
        %v924 = vpop.permute.xlu0 %923
        %927 = vset.pattern.permute.xlu0 0
        %928 = vperm.xlu0 %927, %v920
        %v929 = vpop.permute.xlu0 %928
        %931 = vmatprep.subr.mxu0 0.0
        %932 = vmatpush1.msra.mxu0 %v901
        %933 = vmatprep.subr.mxu0 0.0
        %934 = vmatpush1.msra.mxu0 %v902
        %935 = vmatprep.subr.mxu0 0.0
        %936 = vmatpush1.msra.mxu0 %v903
        %937 = vmatprep.subr.mxu0 0.0
        %938 = vmatpush1.msra.mxu0 %v904
        %939 = vmatprep.subr.mxu0 0.0
        %940 = vmatpush1.msra.mxu0 %v905
        %941 = vmatprep.subr.mxu0 0.0
        %942 = vmatpush1.msra.mxu0 %v906
        %943 = vmatprep.subr.mxu0 0.0
        %944 = vmatpush1.msra.mxu0 %v907
        %945 = vmatprep.subr.mxu0 0.0
        %946 = vmatpush1.msra.mxu0 %v908
        %947 = vmatprep.subr.mxu0 0.0
        %948 = vmatpush1.msra.mxu0 %v909
        %949 = vmatprep.subr.mxu0 0.0
        %950 = vmatpush1.msra.mxu0 %v910
        %951 = vmatprep.subr.mxu0 0.0
        %952 = vmatpush1.msra.mxu0 %v911
        %953 = vmatprep.subr.mxu0 0.0
        %954 = vmatpush1.msra.mxu0 %v912
        %955 = vmatprep.subr.mxu0 0.0
        %956 = vmatpush1.msra.mxu0 %v913
        %957 = vmatprep.subr.mxu0 0.0
        %958 = vmatpush1.msra.mxu0 %v914
        %959 = vmatprep.subr.mxu0 0.0
        %960 = vmatpush1.msra.mxu0 %v915
        %961 = vmatprep.subr.mxu0 0.0
        %962 = vmatpush1.msra.mxu0 %v916
        %963 = vmatprep.subr.mxu0 0.0
        %964 = vmatpush1.msra.mxu0 0.0
        %965 = vmatprep.subr.mxu0 0.0
        %966 = vmatpush1.msra.mxu0 0.0
        %967 = vmatprep.subr.mxu0 0.0
        %968 = vmatpush1.msra.mxu0 0.0
        %969 = vmatprep.subr.mxu0 0.0
        %970 = vmatpush1.msra.mxu0 0.0
        %971 = vmatprep.subr.mxu0 0.0
        %972 = vmatpush1.msra.mxu0 0.0
        %973 = vmatprep.subr.mxu0 0.0
        %974 = vmatpush1.msra.mxu0 0.0
        %975 = vmatprep.subr.mxu0 0.0
        %976 = vmatpush1.msra.mxu0 0.0
        %977 = vmatprep.subr.mxu0 0.0
        %978 = vmatpush1.msra.mxu0 0.0
        %979 = vmatprep.subr.mxu0 0.0
        %980 = vmatpush1.msra.mxu0 0.0
        %981 = vmatprep.subr.mxu0 0.0
        %982 = vmatpush1.msra.mxu0 0.0
        %983 = vmatprep.subr.mxu0 0.0
        %984 = vmatpush1.msra.mxu0 0.0
        %985 = vmatprep.subr.mxu0 0.0
        %986 = vmatpush1.msra.mxu0 0.0
        %987 = vmatprep.subr.mxu0 0.0
        %988 = vmatpush1.msra.mxu0 0.0
        %989 = vmatprep.subr.mxu0 0.0
        %990 = vmatpush1.msra.mxu0 0.0
        %991 = vmatprep.subr.mxu0 0.0
        %992 = vmatpush1.msra.mxu0 0.0
        %993 = vmatprep.subr.mxu0 0.0
        %994 = vmatpush1.msra.mxu0 0.0
        %995 = vmatprep.mubr.f32.mxu0 0.0
        %996 = vmatmul.mubr.f32.gmra.mrb[0].mxu0 %v917
        %v997 = vpop.f32.mrb[0].mxu0
        %v998 = vadd.f32 %v924, %v997
        %v999 = vpop.f32.mrb[0].mxu0
        %1000 = vmatprep.mubr.f32.mxu0 0.0
        %1001 = vmatmul.mubr.f32.gmra.mrb[0].mxu0 %v918
        %v1002 = vpop.f32.mrb[0].mxu0
        %v1003 = vadd.f32 %v929, %v1002
        %v1004 = vpop.f32.mrb[0].mxu0
        %1005 = vdwg.mxu0
        %v1006 = vadd.f32 %v998, %v319
        %v1007 = vadd.f32 %v1003, %v320
        %1008 = vst [vmem:[%s318] sm:$0xff] %v1006
        %1009 = vst [vmem:[%s318 + $0x8] sm:$0xff] %v1007
        %s1010 = sand.u32 %s181, 1
        %s1011 = scalar_lea.sflag [#allocation4], %s1010
        %s1012 = sand.u32 %s181, 1
        %s1013 = smul.addr %s1012, 16
        %s1014 = scalar_lea.vmem [#allocation3], %s1013
        // Predicated region
        $region87: #{tpu_custom_call.1} parent=81 // pred_check
          %p1015 = pneg %p191
        $region88: #{tpu_custom_call.1} parent=81 // pred_check_branch
          %1017 = sbr.rel (%p1015) target = $region90
        $region89: #{tpu_custom_call.1} parent=81 // pred_region
          %s1019 = ssub.s32 256, 256
          %1020 = vsyncadd %s1011, %s1019
          %s1021 = smul.addr %s21, 128
          %s1022 = scalar_lea.hbm %s7, %s1021
          %s1023 = sshll.u32 %s1014, 4
          %s1024 = int_to_ptr.vmem [resolvable:$true] %s1023
          %1029 = dma.vmem_to_hbm [thread:$0]  %s1024, 256, %s1022, %s1011, 128, 256, 8
        $region90: #{tpu_custom_call.1} parent=81 // pred_fallthru
          _
      $region82: #{tpu_custom_call.1} parent=5 // pred_fallthru
        _
      %p1030 = scmp.le.s32.totalorder 2, %s16
      // Predicated region
      $region91: #{tpu_custom_call.1} parent=5 // pred_check
        %p1031 = pneg %p1030
      $region92: #{tpu_custom_call.1} parent=5 // pred_check_branch
        %1033 = sbr.rel (%p1031) target = $region94
      $region93: #{tpu_custom_call.1} parent=5 // pred_region
        %s1034 = ssub.s32 %s16, 2
        // Predicated region
        $region95: #{tpu_custom_call.1} parent=93 // pred_check
          %p1035 = pneg %p197
        $region96: #{tpu_custom_call.1} parent=93 // pred_check_branch
          %1037 = sbr.rel (%p1035) target = $region98
        $region97: #{tpu_custom_call.1} parent=93 // pred_region
          %s1038 = sand.u32 %s182, 1
          %s1039 = scalar_lea.sflag [#allocation4], %s1038
          %s1040 = sand.u32 %s182, 1
          %s1041 = smul.addr %s1040, 16
          %s1042 = scalar_lea.vmem [#allocation3], %s1041
          %1043 = dma.done %s1039, 256
        $region98: #{tpu_custom_call.1} parent=93 // pred_fallthru
          _
      $region94: #{tpu_custom_call.1} parent=5 // pred_fallthru
        _
    $region6: #{tpu_custom_call.1} parent=1 // loop_footer
      %s20 = sadd.s32 1, %s16
    $region7: #{tpu_custom_call.1} parent=1 // loop_footer_branch
      %15 = sbr.rel target = $region3
    $region8: #{tpu_custom_call.1} parent=1 // loop_exit
      _
    %1044 = vsyncpa [#allocation4], 1
    %s1045 = scalar_lea.sflag [#allocation4], 1
    %1046 = vsyncpa %s1045, 1

</llo_original>
